<compile_context>
chip_gen: v6e
topology: v6e:2x2x1
jax: 0.10.0
libtpu: 0.0.40
codegen_flags: <defaults>
</compile_context>

<pallas_src>
import functools

import jax
import jax.numpy as jnp
from jax.experimental import pallas as pl
from jax.experimental.pallas import tpu as pltpu


def _pool_rows_kernel(x_ref, mx_ref, av_ref, *, l_total, l_tile):
    k = pl.program_id(1)

    @pl.when(k == 0)
    def _():
        mx_ref[...] = jnp.full_like(mx_ref, -jnp.inf)
        av_ref[...] = jnp.zeros_like(av_ref)

    x = x_ref[...]                                   # (ROWS, L_TILE), native dtype

    if l_total % l_tile != 0:
        # Last L block is partial: mask the tail columns (static decision).
        col = jax.lax.broadcasted_iota(jnp.int32, x.shape, dimension=1)
        valid = (k * l_tile + col) < l_total
        if jnp.issubdtype(x.dtype, jnp.floating):
            neg = jnp.asarray(jnp.finfo(x.dtype).min, x.dtype)
        else:
            neg = jnp.asarray(jnp.iinfo(x.dtype).min, x.dtype)
        x_max = jnp.where(valid, x, neg)
        x_sum = jnp.where(valid, x, jnp.zeros((), x.dtype))
    else:
        x_max = x
        x_sum = x

    blk_max = jnp.max(x_max, axis=-1, keepdims=True)                  # native dtype
    blk_sum = jnp.sum(x_sum, axis=-1, keepdims=True, dtype=jnp.float32)  # f32 accum

    mx_ref[...] = jnp.maximum(mx_ref[...], blk_max.astype(jnp.float32))
    av_ref[...] = av_ref[...] + blk_sum

    @pl.when(k == pl.num_programs(1) - 1)
    def _():
        av_ref[...] = av_ref[...] * (1.0 / l_total)


def _choose_tiles(R, L, itemsize, block_bytes):
    """Pick (row_tile, l_tile) so one input block is ~block_bytes."""
    if R <= 8:
        row_tile = R                                   # == full dim -> always legal
    else:
        rows_wanted = max(8, block_bytes // (itemsize * max(L, 1)))
        row_tile = min((R // 8) * 8, (rows_wanted // 8) * 8, 4096)
        row_tile = max(8, row_tile)                    # multiple of 8 sublanes
    cols_budget = max(128, block_bytes // (itemsize * row_tile))
    if L <= cols_budget:
        l_tile = L                                     # == full dim -> always legal
    else:
        l_tile = (cols_budget // 128) * 128            # lane multiple
    return row_tile, l_tile


def adaptive_concat_pool1d(x, *, block_bytes=4 * 1024 * 1024):
    """x: (N, C, L) -> (N, 2*C, 1) = concat([max_pool(x), avg_pool(x)], axis=1)."""
    N, C, L = x.shape
    R = N * C
    xr = x.reshape(R, L)

    row_tile, l_tile = _choose_tiles(R, L, x.dtype.itemsize, block_bytes)
    grid = (pl.cdiv(R, row_tile), pl.cdiv(L, l_tile))

    kernel = functools.partial(_pool_rows_kernel, l_total=L, l_tile=l_tile)

    mx, av = pl.pallas_call(
        kernel,
        out_shape=(
            jax.ShapeDtypeStruct((R, 1), jnp.float32),
            jax.ShapeDtypeStruct((R, 1), jnp.float32),
        ),
        grid=grid,
        in_specs=[pl.BlockSpec((row_tile, l_tile), lambda i, k: (i, k))],
        out_specs=(
            pl.BlockSpec((row_tile, 1), lambda i, k: (i, 0)),
            pl.BlockSpec((row_tile, 1), lambda i, k: (i, 0)),
        ),
        compiler_params=pltpu.CompilerParams(
            dimension_semantics=("parallel", "arbitrary"),
        ),
    )(xr)

    # Tiny wrapper-side layout fixup: (R, 1) f32 -> (N, 2C, 1) in input dtype.
    mx = mx.reshape(N, C, 1)
    av = av.reshape(N, C, 1)
    return jnp.concatenate([mx, av], axis=1).astype(x.dtype)


if __name__ == "__main__":
    key = jax.random.PRNGKey(0)
    N, C, L = 2, 4, 16
    x = jax.random.normal(key, (N, C, L), dtype=jnp.float32)

    out = jax.block_until_ready(adaptive_concat_pool1d(x))

    # pure-JAX reference check
    ref = jnp.concatenate(
        [jnp.max(x, axis=-1, keepdims=True), jnp.mean(x, axis=-1, keepdims=True)],
        axis=1,
    )
    assert out.shape == (N, 2 * C, 1), out.shape
    assert jnp.allclose(out, ref, atol=1e-5, rtol=1e-5), float(
        jnp.max(jnp.abs(out - ref))
    )

    print("KERNEL_OK")
</pallas_src>

<mosaic_0001>
module attributes {stable_mosaic.version = 11 : i64} {
  func.func @_pool_rows_kernel(%arg0: i32, %arg1: i32, %arg2: memref<8x16xf32, #tpu.memory_space<vmem>>, %arg3: memref<8x1xf32, #tpu.memory_space<vmem>>, %arg4: memref<8x1xf32, #tpu.memory_space<vmem>>) attributes {dimension_semantics = [#tpu.dimension_semantics<parallel>, #tpu.dimension_semantics<arbitrary>], iteration_bounds = array<i64: 1, 1>, scalar_prefetch = 0 : i64, scratch_operands = 0 : i64, tpu.core_type = #tpu.core_type<tc>, window_params = [{transform_indices = @transform_0, window_bounds = array<i64: 8, 16>}, {transform_indices = @transform_1, window_bounds = array<i64: 8, 1>}, {transform_indices = @transform_2, window_bounds = array<i64: 8, 1>}]} {
    %c0_i32 = arith.constant 0 : i32
    %0 = arith.cmpi eq, %arg1, %c0_i32 : i32
    %1 = arith.extui %0 : i1 to i32
    %c0_i32_0 = arith.constant 0 : i32
    %2 = arith.cmpi ne, %1, %c0_i32_0 : i32
    scf.if %2 {
      %cst_13 = arith.constant 0xFF800000 : f32
      %17 = vector.broadcast %cst_13 : f32 to vector<8x1xf32>
      %c0_14 = arith.constant 0 : index
      %c0_15 = arith.constant 0 : index
      %18 = vector.load %arg3[%c0_14, %c0_15] : memref<8x1xf32, #tpu.memory_space<vmem>>, vector<8x1xf32>
      tpu.vector_store %arg3[%c0_14, %c0_15], %17 {strides = array<i32>} : memref<8x1xf32, #tpu.memory_space<vmem>>, vector<8x1xf32>,
      %cst_16 = arith.constant 0.000000e+00 : f32
      %19 = vector.broadcast %cst_16 : f32 to vector<8x1xf32>
      %c0_17 = arith.constant 0 : index
      %c0_18 = arith.constant 0 : index
      %20 = vector.load %arg4[%c0_17, %c0_18] : memref<8x1xf32, #tpu.memory_space<vmem>>, vector<8x1xf32>
      tpu.vector_store %arg4[%c0_17, %c0_18], %19 {strides = array<i32>} : memref<8x1xf32, #tpu.memory_space<vmem>>, vector<8x1xf32>,
    } else {
    }
    %c0 = arith.constant 0 : index
    %c0_1 = arith.constant 0 : index
    %3 = vector.load %arg2[%c0, %c0_1] : memref<8x16xf32, #tpu.memory_space<vmem>>, vector<8x16xf32>
    %cst = arith.constant dense<0xFF800000> : vector<8xf32>
    %4 = vector.multi_reduction <maximumf>, %3, %cst [1] : vector<8x16xf32> to vector<8xf32>
    %5 = vector.shape_cast %4 : vector<8xf32> to vector<8x1xf32>
    %cst_2 = arith.constant dense<0.000000e+00> : vector<8xf32>
    %6 = vector.multi_reduction <add>, %3, %cst_2 [1] : vector<8x16xf32> to vector<8xf32>
    %7 = vector.shape_cast %6 : vector<8xf32> to vector<8x1xf32>
    %c0_3 = arith.constant 0 : index
    %c0_4 = arith.constant 0 : index
    %8 = vector.load %arg3[%c0_3, %c0_4] : memref<8x1xf32, #tpu.memory_space<vmem>>, vector<8x1xf32>
    %9 = arith.maximumf %8, %5 : vector<8x1xf32>
    %c0_5 = arith.constant 0 : index
    %c0_6 = arith.constant 0 : index
    %10 = vector.load %arg3[%c0_5, %c0_6] : memref<8x1xf32, #tpu.memory_space<vmem>>, vector<8x1xf32>
    tpu.vector_store %arg3[%c0_5, %c0_6], %9 {strides = array<i32>} : memref<8x1xf32, #tpu.memory_space<vmem>>, vector<8x1xf32>,
    %c0_7 = arith.constant 0 : index
    %c0_8 = arith.constant 0 : index
    %11 = vector.load %arg4[%c0_7, %c0_8] : memref<8x1xf32, #tpu.memory_space<vmem>>, vector<8x1xf32>
    %12 = arith.addf %11, %7 : vector<8x1xf32>
    %c0_9 = arith.constant 0 : index
    %c0_10 = arith.constant 0 : index
    %13 = vector.load %arg4[%c0_9, %c0_10] : memref<8x1xf32, #tpu.memory_space<vmem>>, vector<8x1xf32>
    tpu.vector_store %arg4[%c0_9, %c0_10], %12 {strides = array<i32>} : memref<8x1xf32, #tpu.memory_space<vmem>>, vector<8x1xf32>,
    %c0_i32_11 = arith.constant 0 : i32
    %14 = arith.cmpi eq, %arg1, %c0_i32_11 : i32
    %15 = arith.extui %14 : i1 to i32
    %c0_i32_12 = arith.constant 0 : i32
    %16 = arith.cmpi ne, %15, %c0_i32_12 : i32
    scf.if %16 {
      %c0_13 = arith.constant 0 : index
      %c0_14 = arith.constant 0 : index
      %17 = vector.load %arg4[%c0_13, %c0_14] : memref<8x1xf32, #tpu.memory_space<vmem>>, vector<8x1xf32>
      %cst_15 = arith.constant 6.250000e-02 : f32
      %18 = vector.broadcast %cst_15 : f32 to vector<8x1xf32>
      %19 = arith.mulf %17, %18 : vector<8x1xf32>
      %c0_16 = arith.constant 0 : index
      %c0_17 = arith.constant 0 : index
      %20 = vector.load %arg4[%c0_16, %c0_17] : memref<8x1xf32, #tpu.memory_space<vmem>>, vector<8x1xf32>
      tpu.vector_store %arg4[%c0_16, %c0_17], %19 {strides = array<i32>} : memref<8x1xf32, #tpu.memory_space<vmem>>, vector<8x1xf32>,
    } else {
    }
    return
  }
  func.func @transform_0(%arg0: i32, %arg1: i32) -> (i32, i32) {
    %c0_i32 = arith.constant 0 : i32
    return %arg0, %arg1 : i32, i32
  }
  func.func @transform_1(%arg0: i32, %arg1: i32) -> (i32, i32) {
    %c0_i32 = arith.constant 0 : i32
    %c0_i32_0 = arith.constant 0 : i32
    return %arg0, %c0_i32 : i32, i32
  }
  func.func @transform_2(%arg0: i32, %arg1: i32) -> (i32, i32) {
    %c0_i32 = arith.constant 0 : i32
    %c0_i32_0 = arith.constant 0 : i32
    return %arg0, %c0_i32 : i32, i32
  }
}

</mosaic_0001>

<llo_original>
// kernel: tpu_custom_call.1
$region0: #{tpu_custom_call.1}
  #allocation0 [shape = 'u32[]', space=smem, size = 0x4, offset = 0x4, fixed_abs, tag = 'smem constant byte address 0x4 - core index']
  #allocation1 [shape = 'u32[144,128]{1,0:T(1,128)}', space=vmem, size = 0x12000, scoped, tag = 'internal scratch']
  %s0 = inlined_call_operand.hbm [shape: f32[8,16], index: 0, kind: input, shape index: {}]
  %s1 = inlined_call_operand.vmem [shape: f32[8,1], index: 1, kind: output, shape index: {0}]
  %s2 = inlined_call_operand.vmem [shape: f32[8,1], index: 2, kind: output, shape index: {1}]
  %3 = xla_tuple %s1, %s2
  %s4 = sld [smem:[#allocation0]]
  $region34: #{tpu_custom_call.1} parent=0
    _
  %s6 = ssub.s32 1, %s4
  %s7 = scalar_select 0, %s6, %s4
  $region1: #{tpu_custom_call.1} parent=0
    #allocation2 [shape = 'u8[4096]{0}', space=vmem, size = 0x1000, scoped, tag = 'input window, operand 0, single buffered']
    #allocation3 [shape = 's32[1]{0}', space=sflag, size = 0x4, scoped, tag = 'scoped memory for tpu_custom_call.1']
    %8 = vsyncpa [#allocation3], 0
    // Predicated region
    $region2: #{tpu_custom_call.1} parent=1 // pred_check
      _
    $region3: #{tpu_custom_call.1} parent=1 // pred_check_branch
      %10 = sbr.rel (0) target = $region5
    $region4: #{tpu_custom_call.1} parent=1 // pred_region
      %s12 = ssub.s32 128, 128
      %13 = vsyncadd [#allocation3], %s12
      %s15 = sshll.u32 [#allocation2], 4
      %s16 = int_to_ptr.vmem [resolvable:$true] %s15
      %18 = dma.hbm_to_vmem [thread:$0]  %s0, 128, %s16, [#allocation3]
    $region5: #{tpu_custom_call.1} parent=1 // pred_fallthru
      _
    // Predicated region
    $region6: #{tpu_custom_call.1} parent=1 // pred_check
      _
    $region7: #{tpu_custom_call.1} parent=1 // pred_check_branch
      %20 = sbr.rel (0) target = $region9
    $region8: #{tpu_custom_call.1} parent=1 // pred_region
      %21 = dma.done [#allocation3], 128
    $region9: #{tpu_custom_call.1} parent=1 // pred_fallthru
      _
    %p22 = scmp.eq.s32.totalorder 0, 0
    // Predicated region
    $region10: #{tpu_custom_call.1} parent=1 // pred_check
      %p23 = pneg %p22
    $region11: #{tpu_custom_call.1} parent=1 // pred_check_branch
      %25 = sbr.rel (%p23) target = $region13
    $region12: #{tpu_custom_call.1} parent=1 // pred_region
      %vm26 = vcmask 7168
      %27 = vst.msk [vmem:[%s1] sm:$0xff] %vm26, -inf
      %28 = vst.msk [vmem:[%s2] sm:$0xff] %vm26, 0.0
    $region13: #{tpu_custom_call.1} parent=1 // pred_fallthru
      _
    %v29 = vld [vmem:[#allocation2] sm:$0xff]
    %vm30 = vcmask 130048
    %v31 = vsel %vm30, %v29, -inf
    %32 = vmax.xlane.f32.xlu0 %v31
    %v33 = vpop.xlane.xlu0 %32
    %v34 = vsel %vm30, %v29, 0.0
    %35 = vadd.xlane.f32.xlu0 %v34
    %v36 = vpop.xlane.xlu0 %35
    %v37 = vld [vmem:[%s1] sm:$0xff]
    %v38 = vmax.f32 %v37, %v33
    %vm39 = vcmask 7168
    %40 = vst.msk [vmem:[%s1] sm:$0xff] %vm39, %v38
    %v41 = vld [vmem:[%s2] sm:$0xff]
    %v42 = vadd.f32 %v41, %v36
    %43 = vst.msk [vmem:[%s2] sm:$0xff] %vm39, %v42
    // Predicated region
    $region14: #{tpu_custom_call.1} parent=1 // pred_check
      %p44 = pneg %p22
    $region15: #{tpu_custom_call.1} parent=1 // pred_check_branch
      %46 = sbr.rel (%p44) target = $region17
    $region16: #{tpu_custom_call.1} parent=1 // pred_region
      %v47 = vld [vmem:[%s2] sm:$0xff]
      %v48 = vmul.f32 %v47, 0.0625
      %49 = vst.msk [vmem:[%s2] sm:$0xff] %vm39, %v48
    $region17: #{tpu_custom_call.1} parent=1 // pred_fallthru
      _
    // Predicated region
    $region18: #{tpu_custom_call.1} parent=1 // pred_check
      _
    $region19: #{tpu_custom_call.1} parent=1 // pred_check_branch
      %51 = sbr.rel (0) target = $region21
    $region20: #{tpu_custom_call.1} parent=1 // pred_region
      _
    $region21: #{tpu_custom_call.1} parent=1 // pred_fallthru
      _
    // Predicated region
    $region22: #{tpu_custom_call.1} parent=1 // pred_check
      _
    $region23: #{tpu_custom_call.1} parent=1 // pred_check_branch
      %53 = sbr.rel (0) target = $region25
    $region24: #{tpu_custom_call.1} parent=1 // pred_region
      _
    $region25: #{tpu_custom_call.1} parent=1 // pred_fallthru
      _
    // Predicated region
    $region26: #{tpu_custom_call.1} parent=1 // pred_check
      _
    $region27: #{tpu_custom_call.1} parent=1 // pred_check_branch
      %55 = sbr.rel (0) target = $region29
    $region28: #{tpu_custom_call.1} parent=1 // pred_region
      _
    $region29: #{tpu_custom_call.1} parent=1 // pred_fallthru
      _
    // Predicated region
    $region30: #{tpu_custom_call.1} parent=1 // pred_check
      _
    $region31: #{tpu_custom_call.1} parent=1 // pred_check_branch
      %57 = sbr.rel (0) target = $region33
    $region32: #{tpu_custom_call.1} parent=1 // pred_region
      _
    $region33: #{tpu_custom_call.1} parent=1 // pred_fallthru
      _
    %58 = vsyncpa [#allocation3], 1

</llo_original>
